<compile_context>
chip_gen: v7x
topology: tpu7x:2x2x1
jax: 0.10.0
libtpu: 0.0.40
codegen_flags: <defaults>
</compile_context>

<pallas_src>
import jax
import jax.numpy as jnp
from jax.experimental import pallas as pl
from jax.experimental.pallas import tpu as pltpu

LANE = 128     # output class dim is padded to a multiple of this (lane-dense stores)
MAX_TB = 128   # max batch rows per grid step
MAX_TV = 4096  # max vocab (reduction) columns per grid step


def _mlp_kernel(x_ref, w1_ref, b1_ref, w2_ref, b2_ref, o_ref, acc_ref):
    # x_ref:  (TB, TV) f32/bf16    w1_ref: (TV, H) bf16    b1_ref: (1, H)  f32
    # w2_ref: (H, Cp)  bf16        b2_ref: (1, Cp) f32     o_ref:  (TB, Cp) f32
    # acc_ref: (TB, H) f32 scratch, resident across the vocab (reduction) axis.
    v = pl.program_id(1)

    @pl.when(v == 0)
    def _():
        acc_ref[...] = jnp.zeros_like(acc_ref)

    # First matmul: cast the streamed x block to bf16 in-kernel (no extra HBM pass
    # in the wrapper); f32 accumulation on the MXU.
    acc_ref[...] += jnp.dot(
        x_ref[...].astype(jnp.bfloat16), w1_ref[...],
        preferred_element_type=jnp.float32)

    @pl.when(v == pl.num_programs(1) - 1)
    def _():
        # Bias + ReLU in f32 (VPU).  Dropout: identity in eval mode.
        h = jnp.maximum(acc_ref[...] + b1_ref[...], 0.0)
        # Second matmul in bf16 (MXU-native), f32 accumulation, into a lane-dense
        # (TB, 128) output slab.
        logits = jnp.dot(h.astype(jnp.bfloat16), w2_ref[...],
                         preferred_element_type=jnp.float32) + b2_ref[...]
        o_ref[...] = logits.astype(o_ref.dtype)


def _pick_batch_tile(B):
    """Sublane-aligned batch tile; aim for >=2 grid steps (v7x megacore) when possible."""
    if B >= 2 * MAX_TB:
        return MAX_TB
    tb = max(8, (((B + 1) // 2) + 7) // 8 * 8)
    return min(tb, MAX_TB)


def _pick_vocab_tile(V):
    """Largest 128-aligned vocab tile <= MAX_TV that evenly divides V; else full V."""
    if V <= MAX_TV:
        return V
    for tv in range(MAX_TV, 127, -128):
        if V % tv == 0:
            return tv
    return V  # fallback: full-V block (correct, just a larger VMEM footprint)


def _forward_impl(x, w1_bf, b1_2d, w2_bf, b2_2d, TB, TV, Cp, single_buffer_weights):
    B, V = x.shape
    H = w1_bf.shape[1]

    # Constant-index specs stay VMEM-resident across grid steps; single-buffering
    # them halves their VMEM footprint (matters once W1/W2 are tens of MB on v7x).
    const_kwargs = {"pipeline_mode": pl.Buffered(1)} if single_buffer_weights else {}

    grid = (pl.cdiv(B, TB), pl.cdiv(V, TV))

    return pl.pallas_call(
        _mlp_kernel,
        out_shape=jax.ShapeDtypeStruct((B, Cp), jnp.float32),
        grid_spec=pltpu.PrefetchScalarGridSpec(
            num_scalar_prefetch=0,
            grid=grid,
            in_specs=[
                # Activations stream per (batch, vocab) tile (double-buffered).
                pl.BlockSpec((TB, TV), lambda i, v: (i, v)),
                # W1 streams along the vocab axis, reused across batch tiles.
                pl.BlockSpec((TV, H), lambda i, v: (v, 0)),
                # Constant-index biases / W2: VMEM-resident.
                pl.BlockSpec((1, H), lambda i, v: (0, 0), **const_kwargs),
                pl.BlockSpec((H, Cp), lambda i, v: (0, 0), **const_kwargs),
                pl.BlockSpec((1, Cp), lambda i, v: (0, 0), **const_kwargs),
            ],
            out_specs=pl.BlockSpec((TB, Cp), lambda i, v: (i, 0)),
            scratch_shapes=[pltpu.VMEM((TB, H), jnp.float32)],
        ),
        compiler_params=pltpu.CompilerParams(
            dimension_semantics=("parallel", "arbitrary"),  # batch across TCs, V reduce
            vmem_limit_bytes=32 * 1024 * 1024,
        ),
    )(x, w1_bf, b1_2d, w2_bf, b2_2d)


def simple_mlp_forward(x, w1, b1, w2, b2):
    """x: (B, V);  w1: (V, H);  b1: (H,);  w2: (H, C);  b2: (C,)  ->  (B, C) f32."""
    B, V = x.shape
    H = w1.shape[1]
    C = w2.shape[1]

    TB = _pick_batch_tile(B)
    TV = _pick_vocab_tile(V)
    Cp = pl.cdiv(C, LANE) * LANE

    # Weights/biases are tiny relative to x: one-time prep (bf16 weights, padded
    # lane-dense W2/b2).  x itself is passed through untouched.
    w1_bf = w1.astype(jnp.bfloat16)                                        # (V, H)
    b1_2d = b1.reshape(1, H).astype(jnp.float32)                           # (1, H)
    w2_bf = jnp.pad(w2.astype(jnp.bfloat16), ((0, 0), (0, Cp - C)))        # (H, Cp)
    b2_2d = jnp.pad(b2.astype(jnp.float32), (0, Cp - C)).reshape(1, Cp)    # (1, Cp)

    try:
        out_padded = _forward_impl(x, w1_bf, b1_2d, w2_bf, b2_2d,
                                   TB, TV, Cp, single_buffer_weights=True)
    except Exception:
        # Fallback for jax versions that reject pipeline_mode=pl.Buffered(1).
        out_padded = _forward_impl(x, w1_bf, b1_2d, w2_bf, b2_2d,
                                   TB, TV, Cp, single_buffer_weights=False)

    # Slice away the lane-padding columns (batch is not padded).
    return out_padded[:, :C]


def _xavier_uniform(key, fan_in, fan_out, dtype=jnp.float32):
    # Matches torch.nn.init.xavier_uniform_: U(-a, a), a = sqrt(6 / (fan_in + fan_out))
    a = (6.0 / (fan_in + fan_out)) ** 0.5
    return jax.random.uniform(key, (fan_in, fan_out), dtype=dtype, minval=-a, maxval=a)


if __name__ == "__main__":
    # Small shapes implied by the forward: (batch, vocab_size) -> (batch, num_classes)
    batch_size = 8
    vocab_size = 512
    hidden_dim = 128
    num_classes = 8

    key = jax.random.PRNGKey(0)
    k_x, k_w1, k_w2 = jax.random.split(key, 3)

    # Deterministic parameter init (xavier-uniform weights, zero biases), stored
    # pre-transposed as (in, out) for the kernel (hidden.weight^T / output.weight^T).
    w1 = _xavier_uniform(k_w1, vocab_size, hidden_dim)
    b1 = jnp.zeros((hidden_dim,), jnp.float32)
    w2 = _xavier_uniform(k_w2, hidden_dim, num_classes)
    b2 = jnp.zeros((num_classes,), jnp.float32)

    # Bag-of-words features (non-negative counts-like values).
    bow_features = jax.random.uniform(k_x, (batch_size, vocab_size), jnp.float32)

    logits = simple_mlp_forward(bow_features, w1, b1, w2, b2)
    logits = jax.block_until_ready(logits)
    assert logits.shape == (batch_size, num_classes)

    # Reference mirroring the kernel's bf16 MXU inputs / f32 accumulation -> tight tol.
    h_ref = jnp.maximum(
        jnp.dot(bow_features.astype(jnp.bfloat16), w1.astype(jnp.bfloat16),
                preferred_element_type=jnp.float32) + b1, 0.0)
    ref = jnp.dot(h_ref.astype(jnp.bfloat16), w2.astype(jnp.bfloat16),
                  preferred_element_type=jnp.float32) + b2
    assert jnp.allclose(logits, ref, atol=2e-3, rtol=2e-3), \
        float(jnp.max(jnp.abs(logits - ref)))

    # Looser sanity check against the pure-f32 forward (bf16 input rounding).
    ref_f32 = jnp.maximum(bow_features @ w1 + b1, 0.0) @ w2 + b2
    assert jnp.allclose(logits, ref_f32, atol=5e-2, rtol=5e-2)

    print("KERNEL_OK")
</pallas_src>

<mosaic_0001>
module attributes {stable_mosaic.version = 11 : i64} {
  func.func @_mlp_kernel(%arg0: i32, %arg1: i32, %arg2: memref<8x512xf32, #tpu.memory_space<vmem>>, %arg3: memref<512x128xbf16, #tpu.memory_space<vmem>>, %arg4: memref<1x128xf32, #tpu.memory_space<vmem>>, %arg5: memref<128x128xbf16, #tpu.memory_space<vmem>>, %arg6: memref<1x128xf32, #tpu.memory_space<vmem>>, %arg7: memref<8x128xf32, #tpu.memory_space<vmem>>, %arg8: memref<8x128xf32, #tpu.memory_space<vmem>>) attributes {dimension_semantics = [#tpu.dimension_semantics<parallel>, #tpu.dimension_semantics<arbitrary>], iteration_bounds = array<i64: 1, 1>, scalar_prefetch = 0 : i64, scratch_operands = 1 : i64, tpu.core_type = #tpu.core_type<tc>, window_params = [{transform_indices = @transform_0, window_bounds = array<i64: 8, 512>}, {transform_indices = @transform_1, window_bounds = array<i64: 512, 128>}, {pipeline_mode = #tpu.pipeline_mode<synchronous>, transform_indices = @transform_2, window_bounds = array<i64: 1, 128>}, {pipeline_mode = #tpu.pipeline_mode<synchronous>, transform_indices = @transform_3, window_bounds = array<i64: 128, 128>}, {pipeline_mode = #tpu.pipeline_mode<synchronous>, transform_indices = @transform_4, window_bounds = array<i64: 1, 128>}, {transform_indices = @transform_5, window_bounds = array<i64: 8, 128>}]} {
    %c0_i32 = arith.constant 0 : i32
    %0 = arith.cmpi eq, %arg1, %c0_i32 : i32
    %1 = arith.extui %0 : i1 to i32
    %c0_i32_0 = arith.constant 0 : i32
    %2 = arith.cmpi ne, %1, %c0_i32_0 : i32
    scf.if %2 {
      %cst_10 = arith.constant 0.000000e+00 : f32
      %13 = vector.broadcast %cst_10 : f32 to vector<8x128xf32>
      %c0_11 = arith.constant 0 : index
      %c0_12 = arith.constant 0 : index
      %14 = vector.load %arg8[%c0_11, %c0_12] : memref<8x128xf32, #tpu.memory_space<vmem>>, vector<8x128xf32>
      tpu.vector_store %arg8[%c0_11, %c0_12], %13 {strides = array<i32>} : memref<8x128xf32, #tpu.memory_space<vmem>>, vector<8x128xf32>,
    } else {
    }
    %c0 = arith.constant 0 : index
    %c0_1 = arith.constant 0 : index
    %3 = vector.load %arg8[%c0, %c0_1] : memref<8x128xf32, #tpu.memory_space<vmem>>, vector<8x128xf32>
    %c0_2 = arith.constant 0 : index
    %c0_3 = arith.constant 0 : index
    %4 = vector.load %arg2[%c0_2, %c0_3] : memref<8x512xf32, #tpu.memory_space<vmem>>, vector<8x512xf32>
    %5 = arith.truncf %4 : vector<8x512xf32> to vector<8x512xbf16>
    %c0_4 = arith.constant 0 : index
    %c0_5 = arith.constant 0 : index
    %6 = vector.load %arg3[%c0_4, %c0_5] : memref<512x128xbf16, #tpu.memory_space<vmem>>, vector<512x128xbf16>
    %cst = arith.constant dense<0.000000e+00> : vector<8x128xf32>
    %7 = tpu.matmul %5, %6, %cst {dimension_numbers = #tpu.dot_dimension_numbers<[1], [0], [0], [1], [0, 0, 1, 1], [], []>} : vector<8x512xbf16>, vector<512x128xbf16>, vector<8x128xf32> -> vector<8x128xf32>
    %8 = arith.addf %3, %7 : vector<8x128xf32>
    %c0_6 = arith.constant 0 : index
    %c0_7 = arith.constant 0 : index
    %9 = vector.load %arg8[%c0_6, %c0_7] : memref<8x128xf32, #tpu.memory_space<vmem>>, vector<8x128xf32>
    tpu.vector_store %arg8[%c0_6, %c0_7], %8 {strides = array<i32>} : memref<8x128xf32, #tpu.memory_space<vmem>>, vector<8x128xf32>,
    %c0_i32_8 = arith.constant 0 : i32
    %10 = arith.cmpi eq, %arg1, %c0_i32_8 : i32
    %11 = arith.extui %10 : i1 to i32
    %c0_i32_9 = arith.constant 0 : i32
    %12 = arith.cmpi ne, %11, %c0_i32_9 : i32
    scf.if %12 {
      %c0_10 = arith.constant 0 : index
      %c0_11 = arith.constant 0 : index
      %13 = vector.load %arg8[%c0_10, %c0_11] : memref<8x128xf32, #tpu.memory_space<vmem>>, vector<8x128xf32>
      %c0_12 = arith.constant 0 : index
      %c0_13 = arith.constant 0 : index
      %14 = vector.load %arg4[%c0_12, %c0_13] : memref<1x128xf32, #tpu.memory_space<vmem>>, vector<1x128xf32>
      %15 = vector.broadcast %14 : vector<1x128xf32> to vector<8x128xf32>
      %16 = arith.addf %13, %15 : vector<8x128xf32>
      %cst_14 = arith.constant 0.000000e+00 : f32
      %17 = vector.broadcast %cst_14 : f32 to vector<8x128xf32>
      %18 = arith.maximumf %16, %17 : vector<8x128xf32>
      %19 = arith.truncf %18 : vector<8x128xf32> to vector<8x128xbf16>
      %c0_15 = arith.constant 0 : index
      %c0_16 = arith.constant 0 : index
      %20 = vector.load %arg5[%c0_15, %c0_16] : memref<128x128xbf16, #tpu.memory_space<vmem>>, vector<128x128xbf16>
      %cst_17 = arith.constant dense<0.000000e+00> : vector<8x128xf32>
      %21 = tpu.matmul %19, %20, %cst_17 {dimension_numbers = #tpu.dot_dimension_numbers<[1], [0], [0], [1], [0, 0, 1, 1], [], []>} : vector<8x128xbf16>, vector<128x128xbf16>, vector<8x128xf32> -> vector<8x128xf32>
      %c0_18 = arith.constant 0 : index
      %c0_19 = arith.constant 0 : index
      %22 = vector.load %arg6[%c0_18, %c0_19] : memref<1x128xf32, #tpu.memory_space<vmem>>, vector<1x128xf32>
      %23 = vector.broadcast %22 : vector<1x128xf32> to vector<8x128xf32>
      %24 = arith.addf %21, %23 : vector<8x128xf32>
      %c0_20 = arith.constant 0 : index
      %c0_21 = arith.constant 0 : index
      %25 = vector.load %arg7[%c0_20, %c0_21] : memref<8x128xf32, #tpu.memory_space<vmem>>, vector<8x128xf32>
      tpu.vector_store %arg7[%c0_20, %c0_21], %24 {strides = array<i32>} : memref<8x128xf32, #tpu.memory_space<vmem>>, vector<8x128xf32>,
    } else {
    }
    return
  }
  func.func @transform_0(%arg0: i32, %arg1: i32) -> (i32, i32) {
    %c0_i32 = arith.constant 0 : i32
    return %arg0, %arg1 : i32, i32
  }
  func.func @transform_1(%arg0: i32, %arg1: i32) -> (i32, i32) {
    %c0_i32 = arith.constant 0 : i32
    %c0_i32_0 = arith.constant 0 : i32
    return %arg1, %c0_i32 : i32, i32
  }
  func.func @transform_2(%arg0: i32, %arg1: i32) -> (i32, i32) {
    %c0_i32 = arith.constant 0 : i32
    %c0_i32_0 = arith.constant 0 : i32
    %c0_i32_1 = arith.constant 0 : i32
    return %c0_i32, %c0_i32_0 : i32, i32
  }
  func.func @transform_3(%arg0: i32, %arg1: i32) -> (i32, i32) {
    %c0_i32 = arith.constant 0 : i32
    %c0_i32_0 = arith.constant 0 : i32
    %c0_i32_1 = arith.constant 0 : i32
    return %c0_i32, %c0_i32_0 : i32, i32
  }
  func.func @transform_4(%arg0: i32, %arg1: i32) -> (i32, i32) {
    %c0_i32 = arith.constant 0 : i32
    %c0_i32_0 = arith.constant 0 : i32
    %c0_i32_1 = arith.constant 0 : i32
    return %c0_i32, %c0_i32_0 : i32, i32
  }
  func.func @transform_5(%arg0: i32, %arg1: i32) -> (i32, i32) {
    %c0_i32 = arith.constant 0 : i32
    %c0_i32_0 = arith.constant 0 : i32
    return %arg0, %c0_i32 : i32, i32
  }
}

module attributes {stable_mosaic.version = 11 : i64} {
  func.func @_mlp_kernel(%arg0: i32, %arg1: i32, %arg2: memref<8x512xf32, #tpu.memory_space<vmem>>, %arg3: memref<512x128xbf16, #tpu.memory_space<vmem>>, %arg4: memref<1x128xf32, #tpu.memory_space<vmem>>, %arg5: memref<128x128xbf16, #tpu.memory_space<vmem>>, %arg6: memref<1x128xf32, #tpu.memory_space<vmem>>, %arg7: memref<8x128xf32, #tpu.memory_space<vmem>>, %arg8: memref<8x128xf32, #tpu.memory_space<vmem>>) attributes {dimension_semantics = [#tpu.dimension_semantics<parallel>, #tpu.dimension_semantics<arbitrary>], iteration_bounds = array<i64: 1, 1>, scalar_prefetch = 0 : i64, scratch_operands = 1 : i64, tpu.core_type = #tpu.core_type<tc>, window_params = [{transform_indices = @transform_0, window_bounds = array<i64: 8, 512>}, {transform_indices = @transform_1, window_bounds = array<i64: 512, 128>}, {pipeline_mode = #tpu.pipeline_mode<synchronous>, transform_indices = @transform_2, window_bounds = array<i64: 1, 128>}, {pipeline_mode = #tpu.pipeline_mode<synchronous>, transform_indices = @transform_3, window_bounds = array<i64: 128, 128>}, {pipeline_mode = #tpu.pipeline_mode<synchronous>, transform_indices = @transform_4, window_bounds = array<i64: 1, 128>}, {transform_indices = @transform_5, window_bounds = array<i64: 8, 128>}]} {
    %c0_i32 = arith.constant 0 : i32
    %0 = arith.cmpi eq, %arg1, %c0_i32 : i32
    %1 = arith.extui %0 : i1 to i32
    %c0_i32_0 = arith.constant 0 : i32
    %2 = arith.cmpi ne, %1, %c0_i32_0 : i32
    scf.if %2 {
      %cst_10 = arith.constant 0.000000e+00 : f32
      %13 = vector.broadcast %cst_10 : f32 to vector<8x128xf32>
      %c0_11 = arith.constant 0 : index
      %c0_12 = arith.constant 0 : index
      %14 = vector.load %arg8[%c0_11, %c0_12] : memref<8x128xf32, #tpu.memory_space<vmem>>, vector<8x128xf32>
      tpu.vector_store %arg8[%c0_11, %c0_12], %13 {strides = array<i32>} : memref<8x128xf32, #tpu.memory_space<vmem>>, vector<8x128xf32>,
    } else {
    }
    %c0 = arith.constant 0 : index
    %c0_1 = arith.constant 0 : index
    %3 = vector.load %arg8[%c0, %c0_1] : memref<8x128xf32, #tpu.memory_space<vmem>>, vector<8x128xf32>
    %c0_2 = arith.constant 0 : index
    %c0_3 = arith.constant 0 : index
    %4 = vector.load %arg2[%c0_2, %c0_3] : memref<8x512xf32, #tpu.memory_space<vmem>>, vector<8x512xf32>
    %5 = arith.truncf %4 : vector<8x512xf32> to vector<8x512xbf16>
    %c0_4 = arith.constant 0 : index
    %c0_5 = arith.constant 0 : index
    %6 = vector.load %arg3[%c0_4, %c0_5] : memref<512x128xbf16, #tpu.memory_space<vmem>>, vector<512x128xbf16>
    %cst = arith.constant dense<0.000000e+00> : vector<8x128xf32>
    %7 = tpu.matmul %5, %6, %cst {dimension_numbers = #tpu.dot_dimension_numbers<[1], [0], [0], [1], [0, 0, 1, 1], [], []>} : vector<8x512xbf16>, vector<512x128xbf16>, vector<8x128xf32> -> vector<8x128xf32>
    %8 = arith.addf %3, %7 : vector<8x128xf32>
    %c0_6 = arith.constant 0 : index
    %c0_7 = arith.constant 0 : index
    %9 = vector.load %arg8[%c0_6, %c0_7] : memref<8x128xf32, #tpu.memory_space<vmem>>, vector<8x128xf32>
    tpu.vector_store %arg8[%c0_6, %c0_7], %8 {strides = array<i32>} : memref<8x128xf32, #tpu.memory_space<vmem>>, vector<8x128xf32>,
    %c0_i32_8 = arith.constant 0 : i32
    %10 = arith.cmpi eq, %arg1, %c0_i32_8 : i32
    %11 = arith.extui %10 : i1 to i32
    %c0_i32_9 = arith.constant 0 : i32
    %12 = arith.cmpi ne, %11, %c0_i32_9 : i32
    scf.if %12 {
      %c0_10 = arith.constant 0 : index
      %c0_11 = arith.constant 0 : index
      %13 = vector.load %arg8[%c0_10, %c0_11] : memref<8x128xf32, #tpu.memory_space<vmem>>, vector<8x128xf32>
      %c0_12 = arith.constant 0 : index
      %c0_13 = arith.constant 0 : index
      %14 = vector.load %arg4[%c0_12, %c0_13] : memref<1x128xf32, #tpu.memory_space<vmem>>, vector<1x128xf32>
      %15 = vector.broadcast %14 : vector<1x128xf32> to vector<8x128xf32>
      %16 = arith.addf %13, %15 : vector<8x128xf32>
      %cst_14 = arith.constant 0.000000e+00 : f32
      %17 = vector.broadcast %cst_14 : f32 to vector<8x128xf32>
      %18 = arith.maximumf %16, %17 : vector<8x128xf32>
      %19 = arith.truncf %18 : vector<8x128xf32> to vector<8x128xbf16>
      %c0_15 = arith.constant 0 : index
      %c0_16 = arith.constant 0 : index
      %20 = vector.load %arg5[%c0_15, %c0_16] : memref<128x128xbf16, #tpu.memory_space<vmem>>, vector<128x128xbf16>
      %cst_17 = arith.constant dense<0.000000e+00> : vector<8x128xf32>
      %21 = tpu.matmul %19, %20, %cst_17 {dimension_numbers = #tpu.dot_dimension_numbers<[1], [0], [0], [1], [0, 0, 1, 1], [], []>} : vector<8x128xbf16>, vector<128x128xbf16>, vector<8x128xf32> -> vector<8x128xf32>
      %c0_18 = arith.constant 0 : index
      %c0_19 = arith.constant 0 : index
      %22 = vector.load %arg6[%c0_18, %c0_19] : memref<1x128xf32, #tpu.memory_space<vmem>>, vector<1x128xf32>
      %23 = vector.broadcast %22 : vector<1x128xf32> to vector<8x128xf32>
      %24 = arith.addf %21, %23 : vector<8x128xf32>
      %c0_20 = arith.constant 0 : index
      %c0_21 = arith.constant 0 : index
      %25 = vector.load %arg7[%c0_20, %c0_21] : memref<8x128xf32, #tpu.memory_space<vmem>>, vector<8x128xf32>
      tpu.vector_store %arg7[%c0_20, %c0_21], %24 {strides = array<i32>} : memref<8x128xf32, #tpu.memory_space<vmem>>, vector<8x128xf32>,
    } else {
    }
    return
  }
  func.func @transform_0(%arg0: i32, %arg1: i32) -> (i32, i32) {
    %c0_i32 = arith.constant 0 : i32
    return %arg0, %arg1 : i32, i32
  }
  func.func @transform_1(%arg0: i32, %arg1: i32) -> (i32, i32) {
    %c0_i32 = arith.constant 0 : i32
    %c0_i32_0 = arith.constant 0 : i32
    return %arg1, %c0_i32 : i32, i32
  }
  func.func @transform_2(%arg0: i32, %arg1: i32) -> (i32, i32) {
    %c0_i32 = arith.constant 0 : i32
    %c0_i32_0 = arith.constant 0 : i32
    %c0_i32_1 = arith.constant 0 : i32
    return %c0_i32, %c0_i32_0 : i32, i32
  }
  func.func @transform_3(%arg0: i32, %arg1: i32) -> (i32, i32) {
    %c0_i32 = arith.constant 0 : i32
    %c0_i32_0 = arith.constant 0 : i32
    %c0_i32_1 = arith.constant 0 : i32
    return %c0_i32, %c0_i32_0 : i32, i32
  }
  func.func @transform_4(%arg0: i32, %arg1: i32) -> (i32, i32) {
    %c0_i32 = arith.constant 0 : i32
    %c0_i32_0 = arith.constant 0 : i32
    %c0_i32_1 = arith.constant 0 : i32
    return %c0_i32, %c0_i32_0 : i32, i32
  }
  func.func @transform_5(%arg0: i32, %arg1: i32) -> (i32, i32) {
    %c0_i32 = arith.constant 0 : i32
    %c0_i32_0 = arith.constant 0 : i32
    return %arg0, %c0_i32 : i32, i32
  }
}

</mosaic_0001>

<llo_original>
// kernel: tpu_custom_call.1
$region0: #{tpu_custom_call.1}
  #allocation0 [shape = 'u32[]', space=smem, size = 0x4, offset = 0x4, fixed_abs, tag = 'smem constant byte address 0x4 - core index']
  #allocation1 [shape = 'u32[144,128]{1,0:T(1,128)}', space=vmem, size = 0x12000, scoped, tag = 'internal scratch']
  #allocation2 [shape = 'f32[8,128]{1,0:T(8,128)}', space=vmem, size = 0x1000, scoped, tag = 'scratch operand']
  %s0 = inlined_call_operand.hbm [shape: f32[8,512], index: 0, kind: input, shape index: {}]
  %s1 = inlined_call_operand.hbm [shape: bf16[512,128], index: 1, kind: input, shape index: {}]
  %s2 = inlined_call_operand.vmem [shape: f32[1,128], index: 2, kind: input, shape index: {}]
  %s3 = inlined_call_operand.hbm [shape: bf16[128,128], index: 3, kind: input, shape index: {}]
  %s4 = inlined_call_operand.vmem [shape: f32[1,128], index: 4, kind: input, shape index: {}]
  %s5 = inlined_call_operand.hbm [shape: f32[8,128], index: 5, kind: output, shape index: {}]
  %s6 = sld [smem:[#allocation0]]
  $region50: #{tpu_custom_call.1} parent=0
    _
  %s8 = ssub.s32 1, %s6
  %s9 = scalar_select 0, %s8, %s6
  $region1: #{tpu_custom_call.1} parent=0
    #allocation3 [shape = 'u8[16384]{0}', space=vmem, size = 0x4000, scoped, tag = 'input window, operand 0, single buffered']
    #allocation4 [shape = 's32[1]{0}', space=sflag, size = 0x4, scoped, tag = 'scoped memory for tpu_custom_call.1']
    #allocation5 [shape = 's32[1]{0}', space=sflag, size = 0x4, scoped, tag = 'scoped memory for tpu_custom_call.1']
    #allocation6 [shape = 'u8[131072]{0}', space=vmem, size = 0x20000, scoped, tag = 'input window, operand 1, single buffered']
    #allocation7 [shape = 's32[1]{0}', space=sflag, size = 0x4, scoped, tag = 'scoped memory for tpu_custom_call.1']
    #allocation8 [shape = 'u8[32768]{0}', space=vmem, size = 0x8000, scoped, tag = 'input window, operand 3, single buffered']
    #allocation9 [shape = 'u8[4096]{0}', space=vmem, size = 0x1000, scoped, tag = 'output window, operand 0, single buffered']
    %10 = vsyncpa [#allocation4], 0
    %11 = vsyncpa [#allocation7], 0
    %12 = vsyncpa [#allocation5], 0
    // Predicated region
    $region2: #{tpu_custom_call.1} parent=1 // pred_check
      _
    $region3: #{tpu_custom_call.1} parent=1 // pred_check_branch
      %14 = sbr.rel (0) target = $region5
    $region4: #{tpu_custom_call.1} parent=1 // pred_region
      %s16 = ssub.s32 512, 512
      %17 = vsyncadd [#allocation4], %s16
      %s19 = sshll.u32 [#allocation3], 4
      %s20 = int_to_ptr.vmem [resolvable:$true] %s19
      %22 = dma.hbm_to_vmem [thread:$0]  %s0, 512, %s20, [#allocation4]
    $region5: #{tpu_custom_call.1} parent=1 // pred_fallthru
      _
    // Predicated region
    $region6: #{tpu_custom_call.1} parent=1 // pred_check
      _
    $region7: #{tpu_custom_call.1} parent=1 // pred_check_branch
      %24 = sbr.rel (0) target = $region9
    $region8: #{tpu_custom_call.1} parent=1 // pred_region
      %s26 = ssub.s32 4096, 4096
      %27 = vsyncadd [#allocation7], %s26
      %s28 = sshll.u32 [#allocation6], 4
      %s29 = int_to_ptr.vmem [resolvable:$true] %s28
      %34 = dma.hbm_to_vmem [thread:$0]  %s1, 4096, %s29, [#allocation7], 64, 64, 4
    $region9: #{tpu_custom_call.1} parent=1 // pred_fallthru
      _
    // Predicated region
    $region10: #{tpu_custom_call.1} parent=1 // pred_check
      _
    $region11: #{tpu_custom_call.1} parent=1 // pred_check_branch
      %36 = sbr.rel (0) target = $region13
    $region12: #{tpu_custom_call.1} parent=1 // pred_region
      _
    $region13: #{tpu_custom_call.1} parent=1 // pred_fallthru
      _
    // Predicated region
    $region14: #{tpu_custom_call.1} parent=1 // pred_check
      _
    $region15: #{tpu_custom_call.1} parent=1 // pred_check_branch
      %38 = sbr.rel (0) target = $region17
    $region16: #{tpu_custom_call.1} parent=1 // pred_region
      %s40 = ssub.s32 1024, 1024
      %41 = vsyncadd [#allocation7], %s40
      %s42 = sshll.u32 [#allocation8], 4
      %s43 = int_to_ptr.vmem [resolvable:$true] %s42
      %48 = dma.hbm_to_vmem [thread:$0]  %s3, 1024, %s43, [#allocation7], 64, 64, 4
    $region17: #{tpu_custom_call.1} parent=1 // pred_fallthru
      _
    // Predicated region
    $region18: #{tpu_custom_call.1} parent=1 // pred_check
      _
    $region19: #{tpu_custom_call.1} parent=1 // pred_check_branch
      %50 = sbr.rel (0) target = $region21
    $region20: #{tpu_custom_call.1} parent=1 // pred_region
      _
    $region21: #{tpu_custom_call.1} parent=1 // pred_fallthru
      _
    // Predicated region
    $region22: #{tpu_custom_call.1} parent=1 // pred_check
      _
    $region23: #{tpu_custom_call.1} parent=1 // pred_check_branch
      %52 = sbr.rel (0) target = $region25
    $region24: #{tpu_custom_call.1} parent=1 // pred_region
      %53 = dma.done [#allocation4], 512
    $region25: #{tpu_custom_call.1} parent=1 // pred_fallthru
      _
    // Predicated region
    $region26: #{tpu_custom_call.1} parent=1 // pred_check
      _
    $region27: #{tpu_custom_call.1} parent=1 // pred_check_branch
      %55 = sbr.rel (0) target = $region29
    $region28: #{tpu_custom_call.1} parent=1 // pred_region
      %56 = dma.done [#allocation7], 4096
    $region29: #{tpu_custom_call.1} parent=1 // pred_fallthru
      _
    // Predicated region
    $region30: #{tpu_custom_call.1} parent=1 // pred_check
      _
    $region31: #{tpu_custom_call.1} parent=1 // pred_check_branch
      %58 = sbr.rel (0) target = $region33
    $region32: #{tpu_custom_call.1} parent=1 // pred_region
      %59 = dma.done [#allocation7], 1024
    $region33: #{tpu_custom_call.1} parent=1 // pred_fallthru
      _
    %p61 = scmp.eq.s32.totalorder 0, 0
    // Predicated region
    $region34: #{tpu_custom_call.1} parent=1 // pred_check
      %p62 = pneg %p61
    $region35: #{tpu_custom_call.1} parent=1 // pred_check_branch
      %64 = sbr.rel (%p62) target = $region37
    $region36: #{tpu_custom_call.1} parent=1 // pred_region
      %65 = vst [vmem:[#allocation2] sm:$0xff] 0.0
    $region37: #{tpu_custom_call.1} parent=1 // pred_fallthru
      _
    %v66 = vld [vmem:[#allocation2] sm:$0xff]
    %v67 = vld [vmem:[#allocation3] sm:$0xff]
    %v68 = vld [vmem:[#allocation3 + $0x8] sm:$0xff]
    %v69 = vld [vmem:[#allocation3 + $0x10] sm:$0xff]
    %v70 = vld [vmem:[#allocation3 + $0x18] sm:$0xff]
    %v71 = vpack.c.bf16 %v67, %v67
    %v72 = vpack.c.bf16 %v68, %v68
    %v73 = vpack.c.bf16 %v69, %v69
    %v74 = vpack.c.bf16 %v70, %v70
    %v75 = vld [vmem:[#allocation6] sm:$0xf]
    %v76 = vld [vmem:[#allocation6 + $0x4] sm:$0xf]
    %v77 = vld [vmem:[#allocation6 + $0x8] sm:$0xf]
    %v78 = vld [vmem:[#allocation6 + $0xc] sm:$0xf]
    %v79 = vld [vmem:[#allocation6 + $0x10] sm:$0xf]
    %v80 = vld [vmem:[#allocation6 + $0x14] sm:$0xf]
    %v81 = vld [vmem:[#allocation6 + $0x18] sm:$0xf]
    %v82 = vld [vmem:[#allocation6 + $0x1c] sm:$0xf]
    %v83 = vld [vmem:[#allocation6 + $0x20] sm:$0xf]
    %v84 = vld [vmem:[#allocation6 + $0x24] sm:$0xf]
    %v85 = vld [vmem:[#allocation6 + $0x28] sm:$0xf]
    %v86 = vld [vmem:[#allocation6 + $0x2c] sm:$0xf]
    %v87 = vld [vmem:[#allocation6 + $0x30] sm:$0xf]
    %v88 = vld [vmem:[#allocation6 + $0x34] sm:$0xf]
    %v89 = vld [vmem:[#allocation6 + $0x38] sm:$0xf]
    %v90 = vld [vmem:[#allocation6 + $0x3c] sm:$0xf]
    %v91 = vld [vmem:[#allocation6 + $0x40] sm:$0xf]
    %v92 = vld [vmem:[#allocation6 + $0x44] sm:$0xf]
    %v93 = vld [vmem:[#allocation6 + $0x48] sm:$0xf]
    %v94 = vld [vmem:[#allocation6 + $0x4c] sm:$0xf]
    %v95 = vld [vmem:[#allocation6 + $0x50] sm:$0xf]
    %v96 = vld [vmem:[#allocation6 + $0x54] sm:$0xf]
    %v97 = vld [vmem:[#allocation6 + $0x58] sm:$0xf]
    %v98 = vld [vmem:[#allocation6 + $0x5c] sm:$0xf]
    %v99 = vld [vmem:[#allocation6 + $0x60] sm:$0xf]
    %v100 = vld [vmem:[#allocation6 + $0x64] sm:$0xf]
    %v101 = vld [vmem:[#allocation6 + $0x68] sm:$0xf]
    %v102 = vld [vmem:[#allocation6 + $0x6c] sm:$0xf]
    %v103 = vld [vmem:[#allocation6 + $0x70] sm:$0xf]
    %v104 = vld [vmem:[#allocation6 + $0x74] sm:$0xf]
    %v105 = vld [vmem:[#allocation6 + $0x78] sm:$0xf]
    %v106 = vld [vmem:[#allocation6 + $0x7c] sm:$0xf]
    %v107 = vld [vmem:[#allocation6 + $0x80] sm:$0xf]
    %v108 = vld [vmem:[#allocation6 + $0x84] sm:$0xf]
    %v109 = vld [vmem:[#allocation6 + $0x88] sm:$0xf]
    %v110 = vld [vmem:[#allocation6 + $0x8c] sm:$0xf]
    %v111 = vld [vmem:[#allocation6 + $0x90] sm:$0xf]
    %v112 = vld [vmem:[#allocation6 + $0x94] sm:$0xf]
    %v113 = vld [vmem:[#allocation6 + $0x98] sm:$0xf]
    %v114 = vld [vmem:[#allocation6 + $0x9c] sm:$0xf]
    %v115 = vld [vmem:[#allocation6 + $0xa0] sm:$0xf]
    %v116 = vld [vmem:[#allocation6 + $0xa4] sm:$0xf]
    %v117 = vld [vmem:[#allocation6 + $0xa8] sm:$0xf]
    %v118 = vld [vmem:[#allocation6 + $0xac] sm:$0xf]
    %v119 = vld [vmem:[#allocation6 + $0xb0] sm:$0xf]
    %v120 = vld [vmem:[#allocation6 + $0xb4] sm:$0xf]
    %v121 = vld [vmem:[#allocation6 + $0xb8] sm:$0xf]
    %v122 = vld [vmem:[#allocation6 + $0xbc] sm:$0xf]
    %v123 = vld [vmem:[#allocation6 + $0xc0] sm:$0xf]
    %v124 = vld [vmem:[#allocation6 + $0xc4] sm:$0xf]
    %v125 = vld [vmem:[#allocation6 + $0xc8] sm:$0xf]
    %v126 = vld [vmem:[#allocation6 + $0xcc] sm:$0xf]
    %v127 = vld [vmem:[#allocation6 + $0xd0] sm:$0xf]
    %v128 = vld [vmem:[#allocation6 + $0xd4] sm:$0xf]
    %v129 = vld [vmem:[#allocation6 + $0xd8] sm:$0xf]
    %v130 = vld [vmem:[#allocation6 + $0xdc] sm:$0xf]
    %v131 = vld [vmem:[#allocation6 + $0xe0] sm:$0xf]
    %v132 = vld [vmem:[#allocation6 + $0xe4] sm:$0xf]
    %v133 = vld [vmem:[#allocation6 + $0xe8] sm:$0xf]
    %v134 = vld [vmem:[#allocation6 + $0xec] sm:$0xf]
    %v135 = vld [vmem:[#allocation6 + $0xf0] sm:$0xf]
    %v136 = vld [vmem:[#allocation6 + $0xf4] sm:$0xf]
    %v137 = vld [vmem:[#allocation6 + $0xf8] sm:$0xf]
    %v138 = vld [vmem:[#allocation6 + $0xfc] sm:$0xf]
    %v203 = vunpack.c.l.b16 %v75
    %v204 = vunpack.c.l.b16 %v76
    %v205 = vunpack.c.l.b16 %v77
    %v206 = vunpack.c.l.b16 %v78
    %v207 = vunpack.c.l.b16 %v79
    %v208 = vunpack.c.l.b16 %v80
    %v209 = vunpack.c.l.b16 %v81
    %v210 = vunpack.c.l.b16 %v82
    %v211 = vunpack.c.l.b16 %v83
    %v212 = vunpack.c.l.b16 %v84
    %v213 = vunpack.c.l.b16 %v85
    %v214 = vunpack.c.l.b16 %v86
    %v215 = vunpack.c.l.b16 %v87
    %v216 = vunpack.c.l.b16 %v88
    %v217 = vunpack.c.l.b16 %v89
    %v218 = vunpack.c.l.b16 %v90
    %v219 = vunpack.c.l.b16 %v91
    %v220 = vunpack.c.l.b16 %v92
    %v221 = vunpack.c.l.b16 %v93
    %v222 = vunpack.c.l.b16 %v94
    %v223 = vunpack.c.l.b16 %v95
    %v224 = vunpack.c.l.b16 %v96
    %v225 = vunpack.c.l.b16 %v97
    %v226 = vunpack.c.l.b16 %v98
    %v227 = vunpack.c.l.b16 %v99
    %v228 = vunpack.c.l.b16 %v100
    %v229 = vunpack.c.l.b16 %v101
    %v230 = vunpack.c.l.b16 %v102
    %v231 = vunpack.c.l.b16 %v103
    %v232 = vunpack.c.l.b16 %v104
    %v233 = vunpack.c.l.b16 %v105
    %v234 = vunpack.c.l.b16 %v106
    %v235 = vunpack.c.l.b16 %v107
    %v236 = vunpack.c.l.b16 %v108
    %v237 = vunpack.c.l.b16 %v109
    %v238 = vunpack.c.l.b16 %v110
    %v239 = vunpack.c.l.b16 %v111
    %v240 = vunpack.c.l.b16 %v112
    %v241 = vunpack.c.l.b16 %v113
    %v242 = vunpack.c.l.b16 %v114
    %v243 = vunpack.c.l.b16 %v115
    %v244 = vunpack.c.l.b16 %v116
    %v245 = vunpack.c.l.b16 %v117
    %v246 = vunpack.c.l.b16 %v118
    %v247 = vunpack.c.l.b16 %v119
    %v248 = vunpack.c.l.b16 %v120
    %v249 = vunpack.c.l.b16 %v121
    %v250 = vunpack.c.l.b16 %v122
    %v251 = vunpack.c.l.b16 %v123
    %v252 = vunpack.c.l.b16 %v124
    %v253 = vunpack.c.l.b16 %v125
    %v254 = vunpack.c.l.b16 %v126
    %v255 = vunpack.c.l.b16 %v127
    %v256 = vunpack.c.l.b16 %v128
    %v257 = vunpack.c.l.b16 %v129
    %v258 = vunpack.c.l.b16 %v130
    %v259 = vunpack.c.l.b16 %v131
    %v260 = vunpack.c.l.b16 %v132
    %v261 = vunpack.c.l.b16 %v133
    %v262 = vunpack.c.l.b16 %v134
    %v263 = vunpack.c.l.b16 %v135
    %v264 = vunpack.c.l.b16 %v136
    %v265 = vunpack.c.l.b16 %v137
    %v266 = vunpack.c.l.b16 %v138
    %v267 = vpack.c.b16 %v204, %v203
    %v268 = vpack.c.b16 %v206, %v205
    %v269 = vpack.c.b16 %v208, %v207
    %v270 = vpack.c.b16 %v210, %v209
    %v271 = vpack.c.b16 %v212, %v211
    %v272 = vpack.c.b16 %v214, %v213
    %v273 = vpack.c.b16 %v216, %v215
    %v274 = vpack.c.b16 %v218, %v217
    %v275 = vpack.c.b16 %v220, %v219
    %v276 = vpack.c.b16 %v222, %v221
    %v277 = vpack.c.b16 %v224, %v223
    %v278 = vpack.c.b16 %v226, %v225
    %v279 = vpack.c.b16 %v228, %v227
    %v280 = vpack.c.b16 %v230, %v229
    %v281 = vpack.c.b16 %v232, %v231
    %v282 = vpack.c.b16 %v234, %v233
    %v283 = vpack.c.b16 %v236, %v235
    %v284 = vpack.c.b16 %v238, %v237
    %v285 = vpack.c.b16 %v240, %v239
    %v286 = vpack.c.b16 %v242, %v241
    %v287 = vpack.c.b16 %v244, %v243
    %v288 = vpack.c.b16 %v246, %v245
    %v289 = vpack.c.b16 %v248, %v247
    %v290 = vpack.c.b16 %v250, %v249
    %v291 = vpack.c.b16 %v252, %v251
    %v292 = vpack.c.b16 %v254, %v253
    %v293 = vpack.c.b16 %v256, %v255
    %v294 = vpack.c.b16 %v258, %v257
    %v295 = vpack.c.b16 %v260, %v259
    %v296 = vpack.c.b16 %v262, %v261
    %v297 = vpack.c.b16 %v264, %v263
    %v298 = vpack.c.b16 %v266, %v265
    %331 = vmatprep.subr.bf16.mxu0 0
    %332 = vmatpush1.bf16.msra.mxu0 %v267
    %333 = vmatprep.subr.bf16.mxu0 0
    %334 = vmatpush1.bf16.msra.mxu0 %v268
    %335 = vmatprep.subr.bf16.mxu0 0
    %336 = vmatpush1.bf16.msra.mxu0 %v269
    %337 = vmatprep.subr.bf16.mxu0 0
    %338 = vmatpush1.bf16.msra.mxu0 %v270
    %339 = vmatprep.subr.bf16.mxu0 0
    %340 = vmatpush1.bf16.msra.mxu0 %v271
    %341 = vmatprep.subr.bf16.mxu0 0
    %342 = vmatpush1.bf16.msra.mxu0 %v272
    %343 = vmatprep.subr.bf16.mxu0 0
    %344 = vmatpush1.bf16.msra.mxu0 %v273
    %345 = vmatprep.subr.bf16.mxu0 0
    %346 = vmatpush1.bf16.msra.mxu0 %v274
    %347 = vmatprep.subr.bf16.mxu0 0
    %348 = vmatpush1.bf16.msra.mxu0 %v275
    %349 = vmatprep.subr.bf16.mxu0 0
    %350 = vmatpush1.bf16.msra.mxu0 %v276
    %351 = vmatprep.subr.bf16.mxu0 0
    %352 = vmatpush1.bf16.msra.mxu0 %v277
    %353 = vmatprep.subr.bf16.mxu0 0
    %354 = vmatpush1.bf16.msra.mxu0 %v278
    %355 = vmatprep.subr.bf16.mxu0 0
    %356 = vmatpush1.bf16.msra.mxu0 %v279
    %357 = vmatprep.subr.bf16.mxu0 0
    %358 = vmatpush1.bf16.msra.mxu0 %v280
    %359 = vmatprep.subr.bf16.mxu0 0
    %360 = vmatpush1.bf16.msra.mxu0 %v281
    %361 = vmatprep.subr.bf16.mxu0 0
    %362 = vmatpush1.bf16.msra.mxu0 %v282
    %363 = vmatprep.mubr.bf16.mxu0 %v72
    %364 = vmatmul.mubr.bf16.gmra.mrb[0].mxu0 %v71
    %v365 = vpop.f32.mrb[0].mxu0
    %v366 = vadd.f32 0.0, %v365
    %v367 = vpop.f32.mrb[0].mxu0
    %v368 = vpop.f32.mrb[0].mxu0
    %v369 = vpop.f32.mrb[0].mxu0
    %370 = vdwg.mxu0
    %371 = vmatprep.subr.bf16.mxu0 0
    %372 = vmatpush1.bf16.msra.mxu0 %v283
    %373 = vmatprep.subr.bf16.mxu0 0
    %374 = vmatpush1.bf16.msra.mxu0 %v284
    %375 = vmatprep.subr.bf16.mxu0 0
    %376 = vmatpush1.bf16.msra.mxu0 %v285
    %377 = vmatprep.subr.bf16.mxu0 0
    %378 = vmatpush1.bf16.msra.mxu0 %v286
    %379 = vmatprep.subr.bf16.mxu0 0
    %380 = vmatpush1.bf16.msra.mxu0 %v287
    %381 = vmatprep.subr.bf16.mxu0 0
    %382 = vmatpush1.bf16.msra.mxu0 %v288
    %383 = vmatprep.subr.bf16.mxu0 0
    %384 = vmatpush1.bf16.msra.mxu0 %v289
    %385 = vmatprep.subr.bf16.mxu0 0
    %386 = vmatpush1.bf16.msra.mxu0 %v290
    %387 = vmatprep.subr.bf16.mxu0 0
    %388 = vmatpush1.bf16.msra.mxu0 %v291
    %389 = vmatprep.subr.bf16.mxu0 0
    %390 = vmatpush1.bf16.msra.mxu0 %v292
    %391 = vmatprep.subr.bf16.mxu0 0
    %392 = vmatpush1.bf16.msra.mxu0 %v293
    %393 = vmatprep.subr.bf16.mxu0 0
    %394 = vmatpush1.bf16.msra.mxu0 %v294
    %395 = vmatprep.subr.bf16.mxu0 0
    %396 = vmatpush1.bf16.msra.mxu0 %v295
    %397 = vmatprep.subr.bf16.mxu0 0
    %398 = vmatpush1.bf16.msra.mxu0 %v296
    %399 = vmatprep.subr.bf16.mxu0 0
    %400 = vmatpush1.bf16.msra.mxu0 %v297
    %401 = vmatprep.subr.bf16.mxu0 0
    %402 = vmatpush1.bf16.msra.mxu0 %v298
    %403 = vmatprep.mubr.bf16.mxu0 %v74
    %404 = vmatmul.mubr.bf16.gmra.mrb[0].mxu0 %v73
    %v405 = vpop.f32.mrb[0].mxu0
    %v406 = vadd.f32 %v366, %v405
    %v407 = vpop.f32.mrb[0].mxu0
    %v408 = vpop.f32.mrb[0].mxu0
    %v409 = vpop.f32.mrb[0].mxu0
    %410 = vdwg.mxu0
    %v411 = vadd.f32 %v66, %v406
    %412 = vst [vmem:[#allocation2] sm:$0xff] %v411
    // Predicated region
    $region38: #{tpu_custom_call.1} parent=1 // pred_check
      %p413 = pneg %p61
    $region39: #{tpu_custom_call.1} parent=1 // pred_check_branch
      %415 = sbr.rel (%p413) target = $region41
    $region40: #{tpu_custom_call.1} parent=1 // pred_region
      %v416 = vld [vmem:[#allocation2] sm:$0xff]
      %v417 = vld [vmem:[%s2] sm:$0x1]
      %v419 = vlaneseq
      %v420 = vshrl.u32 %v419, 7
      %v421 = vsub.s32 0, %v420
      %v422 = vrot.slane %v417, %v421
      %v424 = vadd.f32 %v416, %v422
      %v425 = vmax.f32 %v424, 0.0
      %v426 = vpack.c.bf16 %v425, %v425
      %v427 = vld [vmem:[#allocation8] sm:$0xf]
      %v428 = vld [vmem:[#allocation8 + $0x4] sm:$0xf]
      %v429 = vld [vmem:[#allocation8 + $0x8] sm:$0xf]
      %v430 = vld [vmem:[#allocation8 + $0xc] sm:$0xf]
      %v431 = vld [vmem:[#allocation8 + $0x10] sm:$0xf]
      %v432 = vld [vmem:[#allocation8 + $0x14] sm:$0xf]
      %v433 = vld [vmem:[#allocation8 + $0x18] sm:$0xf]
      %v434 = vld [vmem:[#allocation8 + $0x1c] sm:$0xf]
      %v435 = vld [vmem:[#allocation8 + $0x20] sm:$0xf]
      %v436 = vld [vmem:[#allocation8 + $0x24] sm:$0xf]
      %v437 = vld [vmem:[#allocation8 + $0x28] sm:$0xf]
      %v438 = vld [vmem:[#allocation8 + $0x2c] sm:$0xf]
      %v439 = vld [vmem:[#allocation8 + $0x30] sm:$0xf]
      %v440 = vld [vmem:[#allocation8 + $0x34] sm:$0xf]
      %v441 = vld [vmem:[#allocation8 + $0x38] sm:$0xf]
      %v442 = vld [vmem:[#allocation8 + $0x3c] sm:$0xf]
      %v443 = vld [vmem:[%s4] sm:$0x1]
      %v445 = vlaneseq
      %v446 = vshrl.u32 %v445, 7
      %v447 = vsub.s32 0, %v446
      %v448 = vrot.slane %v443, %v447
      %v466 = vunpack.c.l.b16 %v427
      %v467 = vunpack.c.l.b16 %v428
      %v468 = vunpack.c.l.b16 %v429
      %v469 = vunpack.c.l.b16 %v430
      %v470 = vunpack.c.l.b16 %v431
      %v471 = vunpack.c.l.b16 %v432
      %v472 = vunpack.c.l.b16 %v433
      %v473 = vunpack.c.l.b16 %v434
      %v474 = vunpack.c.l.b16 %v435
      %v475 = vunpack.c.l.b16 %v436
      %v476 = vunpack.c.l.b16 %v437
      %v477 = vunpack.c.l.b16 %v438
      %v478 = vunpack.c.l.b16 %v439
      %v479 = vunpack.c.l.b16 %v440
      %v480 = vunpack.c.l.b16 %v441
      %v481 = vunpack.c.l.b16 %v442
      %v482 = vpack.c.b16 %v467, %v466
      %v483 = vpack.c.b16 %v469, %v468
      %v484 = vpack.c.b16 %v471, %v470
      %v485 = vpack.c.b16 %v473, %v472
      %v486 = vpack.c.b16 %v475, %v474
      %v487 = vpack.c.b16 %v477, %v476
      %v488 = vpack.c.b16 %v479, %v478
      %v489 = vpack.c.b16 %v481, %v480
      %498 = vmatprep.subr.bf16.mxu0 0
      %499 = vmatpush1.bf16.msra.mxu0 %v482
      %500 = vmatprep.subr.bf16.mxu0 0
      %501 = vmatpush1.bf16.msra.mxu0 %v483
      %502 = vmatprep.subr.bf16.mxu0 0
      %503 = vmatpush1.bf16.msra.mxu0 %v484
      %504 = vmatprep.subr.bf16.mxu0 0
      %505 = vmatpush1.bf16.msra.mxu0 %v485
      %506 = vmatprep.subr.bf16.mxu0 0
      %507 = vmatpush1.bf16.msra.mxu0 %v486
      %508 = vmatprep.subr.bf16.mxu0 0
      %509 = vmatpush1.bf16.msra.mxu0 %v487
      %510 = vmatprep.subr.bf16.mxu0 0
      %511 = vmatpush1.bf16.msra.mxu0 %v488
      %512 = vmatprep.subr.bf16.mxu0 0
      %513 = vmatpush1.bf16.msra.mxu0 %v489
      %514 = vmatprep.subr.bf16.mxu0 0
      %515 = vmatpush1.bf16.msra.mxu0 0
      %516 = vmatprep.subr.bf16.mxu0 0
      %517 = vmatpush1.bf16.msra.mxu0 0
      %518 = vmatprep.subr.bf16.mxu0 0
      %519 = vmatpush1.bf16.msra.mxu0 0
      %520 = vmatprep.subr.bf16.mxu0 0
      %521 = vmatpush1.bf16.msra.mxu0 0
      %522 = vmatprep.subr.bf16.mxu0 0
      %523 = vmatpush1.bf16.msra.mxu0 0
      %524 = vmatprep.subr.bf16.mxu0 0
      %525 = vmatpush1.bf16.msra.mxu0 0
      %526 = vmatprep.subr.bf16.mxu0 0
      %527 = vmatpush1.bf16.msra.mxu0 0
      %528 = vmatprep.subr.bf16.mxu0 0
      %529 = vmatpush1.bf16.msra.mxu0 0
      %530 = vmatprep.mubr.bf16.mxu0 0
      %531 = vmatmul.mubr.bf16.gmra.mrb[0].mxu0 %v426
      %v532 = vpop.f32.mrb[0].mxu0
      %v533 = vadd.f32 %v448, %v532
      %v534 = vpop.f32.mrb[0].mxu0
      %v535 = vpop.f32.mrb[0].mxu0
      %v536 = vpop.f32.mrb[0].mxu0
      %537 = vdwg.mxu0
      %538 = vst [vmem:[#allocation9] sm:$0xff] %v533
    $region41: #{tpu_custom_call.1} parent=1 // pred_fallthru
      _
    // Predicated region
    $region42: #{tpu_custom_call.1} parent=1 // pred_check
      _
    $region43: #{tpu_custom_call.1} parent=1 // pred_check_branch
      %540 = sbr.rel (0) target = $region45
    $region44: #{tpu_custom_call.1} parent=1 // pred_region
      %s542 = ssub.s32 128, 128
      %543 = vsyncadd [#allocation5], %s542
      %s545 = sshll.u32 [#allocation9], 4
      %s546 = int_to_ptr.vmem [resolvable:$true] %s545
      %548 = dma.vmem_to_hbm [thread:$0]  %s546, 128, %s5, [#allocation5]
    $region45: #{tpu_custom_call.1} parent=1 // pred_fallthru
      _
    // Predicated region
    $region46: #{tpu_custom_call.1} parent=1 // pred_check
      _
    $region47: #{tpu_custom_call.1} parent=1 // pred_check_branch
      %550 = sbr.rel (0) target = $region49
    $region48: #{tpu_custom_call.1} parent=1 // pred_region
      %551 = dma.done [#allocation5], 128
    $region49: #{tpu_custom_call.1} parent=1 // pred_fallthru
      _
    %552 = vsyncpa [#allocation4], 1
    %553 = vsyncpa [#allocation7], 1
    %554 = vsyncpa [#allocation5], 1

// kernel: tpu_custom_call.1
$region0: #{tpu_custom_call.1}
  #allocation0 [shape = 'u32[]', space=smem, size = 0x4, offset = 0x4, fixed_abs, tag = 'smem constant byte address 0x4 - core index']
  #allocation1 [shape = 'u32[144,128]{1,0:T(1,128)}', space=vmem, size = 0x12000, scoped, tag = 'internal scratch']
  #allocation2 [shape = 'f32[8,128]{1,0:T(8,128)}', space=vmem, size = 0x1000, scoped, tag = 'scratch operand']
  %s0 = inlined_call_operand.hbm [shape: f32[8,512], index: 0, kind: input, shape index: {}]
  %s1 = inlined_call_operand.hbm [shape: bf16[512,128], index: 1, kind: input, shape index: {}]
  %s2 = inlined_call_operand.vmem [shape: f32[1,128], index: 2, kind: input, shape index: {}]
  %s3 = inlined_call_operand.hbm [shape: bf16[128,128], index: 3, kind: input, shape index: {}]
  %s4 = inlined_call_operand.vmem [shape: f32[1,128], index: 4, kind: input, shape index: {}]
  %s5 = inlined_call_operand.hbm [shape: f32[8,128], index: 5, kind: output, shape index: {}]
  %s6 = sld [smem:[#allocation0]]
  $region50: #{tpu_custom_call.1} parent=0
    _
  %s8 = ssub.s32 1, %s6
  %s9 = scalar_select 0, %s8, %s6
  $region1: #{tpu_custom_call.1} parent=0
    #allocation3 [shape = 'u8[16384]{0}', space=vmem, size = 0x4000, scoped, tag = 'input window, operand 0, single buffered']
    #allocation4 [shape = 's32[1]{0}', space=sflag, size = 0x4, scoped, tag = 'scoped memory for tpu_custom_call.1']
    #allocation5 [shape = 's32[1]{0}', space=sflag, size = 0x4, scoped, tag = 'scoped memory for tpu_custom_call.1']
    #allocation6 [shape = 'u8[131072]{0}', space=vmem, size = 0x20000, scoped, tag = 'input window, operand 1, single buffered']
    #allocation7 [shape = 's32[1]{0}', space=sflag, size = 0x4, scoped, tag = 'scoped memory for tpu_custom_call.1']
    #allocation8 [shape = 'u8[32768]{0}', space=vmem, size = 0x8000, scoped, tag = 'input window, operand 3, single buffered']
    #allocation9 [shape = 'u8[4096]{0}', space=vmem, size = 0x1000, scoped, tag = 'output window, operand 0, single buffered']
    %10 = vsyncpa [#allocation4], 0
    %11 = vsyncpa [#allocation7], 0
    %12 = vsyncpa [#allocation5], 0
    // Predicated region
    $region2: #{tpu_custom_call.1} parent=1 // pred_check
      _
    $region3: #{tpu_custom_call.1} parent=1 // pred_check_branch
      %14 = sbr.rel (0) target = $region5
    $region4: #{tpu_custom_call.1} parent=1 // pred_region
      %s16 = ssub.s32 512, 512
      %17 = vsyncadd [#allocation4], %s16
      %s19 = sshll.u32 [#allocation3], 4
      %s20 = int_to_ptr.vmem [resolvable:$true] %s19
      %22 = dma.hbm_to_vmem [thread:$0]  %s0, 512, %s20, [#allocation4]
    $region5: #{tpu_custom_call.1} parent=1 // pred_fallthru
      _
    // Predicated region
    $region6: #{tpu_custom_call.1} parent=1 // pred_check
      _
    $region7: #{tpu_custom_call.1} parent=1 // pred_check_branch
      %24 = sbr.rel (0) target = $region9
    $region8: #{tpu_custom_call.1} parent=1 // pred_region
      %s26 = ssub.s32 4096, 4096
      %27 = vsyncadd [#allocation7], %s26
      %s28 = sshll.u32 [#allocation6], 4
      %s29 = int_to_ptr.vmem [resolvable:$true] %s28
      %34 = dma.hbm_to_vmem [thread:$0]  %s1, 4096, %s29, [#allocation7], 64, 64, 4
    $region9: #{tpu_custom_call.1} parent=1 // pred_fallthru
      _
    // Predicated region
    $region10: #{tpu_custom_call.1} parent=1 // pred_check
      _
    $region11: #{tpu_custom_call.1} parent=1 // pred_check_branch
      %36 = sbr.rel (0) target = $region13
    $region12: #{tpu_custom_call.1} parent=1 // pred_region
      _
    $region13: #{tpu_custom_call.1} parent=1 // pred_fallthru
      _
    // Predicated region
    $region14: #{tpu_custom_call.1} parent=1 // pred_check
      _
    $region15: #{tpu_custom_call.1} parent=1 // pred_check_branch
      %38 = sbr.rel (0) target = $region17
    $region16: #{tpu_custom_call.1} parent=1 // pred_region
      %s40 = ssub.s32 1024, 1024
      %41 = vsyncadd [#allocation7], %s40
      %s42 = sshll.u32 [#allocation8], 4
      %s43 = int_to_ptr.vmem [resolvable:$true] %s42
      %48 = dma.hbm_to_vmem [thread:$0]  %s3, 1024, %s43, [#allocation7], 64, 64, 4
    $region17: #{tpu_custom_call.1} parent=1 // pred_fallthru
      _
    // Predicated region
    $region18: #{tpu_custom_call.1} parent=1 // pred_check
      _
    $region19: #{tpu_custom_call.1} parent=1 // pred_check_branch
      %50 = sbr.rel (0) target = $region21
    $region20: #{tpu_custom_call.1} parent=1 // pred_region
      _
    $region21: #{tpu_custom_call.1} parent=1 // pred_fallthru
      _
    // Predicated region
    $region22: #{tpu_custom_call.1} parent=1 // pred_check
      _
    $region23: #{tpu_custom_call.1} parent=1 // pred_check_branch
      %52 = sbr.rel (0) target = $region25
    $region24: #{tpu_custom_call.1} parent=1 // pred_region
      %53 = dma.done [#allocation4], 512
    $region25: #{tpu_custom_call.1} parent=1 // pred_fallthru
      _
    // Predicated region
    $region26: #{tpu_custom_call.1} parent=1 // pred_check
      _
    $region27: #{tpu_custom_call.1} parent=1 // pred_check_branch
      %55 = sbr.rel (0) target = $region29
    $region28: #{tpu_custom_call.1} parent=1 // pred_region
      %56 = dma.done [#allocation7], 4096
    $region29: #{tpu_custom_call.1} parent=1 // pred_fallthru
      _
    // Predicated region
    $region30: #{tpu_custom_call.1} parent=1 // pred_check
      _
    $region31: #{tpu_custom_call.1} parent=1 // pred_check_branch
      %58 = sbr.rel (0) target = $region33
    $region32: #{tpu_custom_call.1} parent=1 // pred_region
      %59 = dma.done [#allocation7], 1024
    $region33: #{tpu_custom_call.1} parent=1 // pred_fallthru
      _
    %p61 = scmp.eq.s32.totalorder 0, 0
    // Predicated region
    $region34: #{tpu_custom_call.1} parent=1 // pred_check
      %p62 = pneg %p61
    $region35: #{tpu_custom_call.1} parent=1 // pred_check_branch
      %64 = sbr.rel (%p62) target = $region37
    $region36: #{tpu_custom_call.1} parent=1 // pred_region
      %65 = vst [vmem:[#allocation2] sm:$0xff] 0.0
    $region37: #{tpu_custom_call.1} parent=1 // pred_fallthru
      _
    %v66 = vld [vmem:[#allocation2] sm:$0xff]
    %v67 = vld [vmem:[#allocation3] sm:$0xff]
    %v68 = vld [vmem:[#allocation3 + $0x8] sm:$0xff]
    %v69 = vld [vmem:[#allocation3 + $0x10] sm:$0xff]
    %v70 = vld [vmem:[#allocation3 + $0x18] sm:$0xff]
    %v71 = vpack.c.bf16 %v67, %v67
    %v72 = vpack.c.bf16 %v68, %v68
    %v73 = vpack.c.bf16 %v69, %v69
    %v74 = vpack.c.bf16 %v70, %v70
    %v75 = vld [vmem:[#allocation6] sm:$0xf]
    %v76 = vld [vmem:[#allocation6 + $0x4] sm:$0xf]
    %v77 = vld [vmem:[#allocation6 + $0x8] sm:$0xf]
    %v78 = vld [vmem:[#allocation6 + $0xc] sm:$0xf]
    %v79 = vld [vmem:[#allocation6 + $0x10] sm:$0xf]
    %v80 = vld [vmem:[#allocation6 + $0x14] sm:$0xf]
    %v81 = vld [vmem:[#allocation6 + $0x18] sm:$0xf]
    %v82 = vld [vmem:[#allocation6 + $0x1c] sm:$0xf]
    %v83 = vld [vmem:[#allocation6 + $0x20] sm:$0xf]
    %v84 = vld [vmem:[#allocation6 + $0x24] sm:$0xf]
    %v85 = vld [vmem:[#allocation6 + $0x28] sm:$0xf]
    %v86 = vld [vmem:[#allocation6 + $0x2c] sm:$0xf]
    %v87 = vld [vmem:[#allocation6 + $0x30] sm:$0xf]
    %v88 = vld [vmem:[#allocation6 + $0x34] sm:$0xf]
    %v89 = vld [vmem:[#allocation6 + $0x38] sm:$0xf]
    %v90 = vld [vmem:[#allocation6 + $0x3c] sm:$0xf]
    %v91 = vld [vmem:[#allocation6 + $0x40] sm:$0xf]
    %v92 = vld [vmem:[#allocation6 + $0x44] sm:$0xf]
    %v93 = vld [vmem:[#allocation6 + $0x48] sm:$0xf]
    %v94 = vld [vmem:[#allocation6 + $0x4c] sm:$0xf]
    %v95 = vld [vmem:[#allocation6 + $0x50] sm:$0xf]
    %v96 = vld [vmem:[#allocation6 + $0x54] sm:$0xf]
    %v97 = vld [vmem:[#allocation6 + $0x58] sm:$0xf]
    %v98 = vld [vmem:[#allocation6 + $0x5c] sm:$0xf]
    %v99 = vld [vmem:[#allocation6 + $0x60] sm:$0xf]
    %v100 = vld [vmem:[#allocation6 + $0x64] sm:$0xf]
    %v101 = vld [vmem:[#allocation6 + $0x68] sm:$0xf]
    %v102 = vld [vmem:[#allocation6 + $0x6c] sm:$0xf]
    %v103 = vld [vmem:[#allocation6 + $0x70] sm:$0xf]
    %v104 = vld [vmem:[#allocation6 + $0x74] sm:$0xf]
    %v105 = vld [vmem:[#allocation6 + $0x78] sm:$0xf]
    %v106 = vld [vmem:[#allocation6 + $0x7c] sm:$0xf]
    %v107 = vld [vmem:[#allocation6 + $0x80] sm:$0xf]
    %v108 = vld [vmem:[#allocation6 + $0x84] sm:$0xf]
    %v109 = vld [vmem:[#allocation6 + $0x88] sm:$0xf]
    %v110 = vld [vmem:[#allocation6 + $0x8c] sm:$0xf]
    %v111 = vld [vmem:[#allocation6 + $0x90] sm:$0xf]
    %v112 = vld [vmem:[#allocation6 + $0x94] sm:$0xf]
    %v113 = vld [vmem:[#allocation6 + $0x98] sm:$0xf]
    %v114 = vld [vmem:[#allocation6 + $0x9c] sm:$0xf]
    %v115 = vld [vmem:[#allocation6 + $0xa0] sm:$0xf]
    %v116 = vld [vmem:[#allocation6 + $0xa4] sm:$0xf]
    %v117 = vld [vmem:[#allocation6 + $0xa8] sm:$0xf]
    %v118 = vld [vmem:[#allocation6 + $0xac] sm:$0xf]
    %v119 = vld [vmem:[#allocation6 + $0xb0] sm:$0xf]
    %v120 = vld [vmem:[#allocation6 + $0xb4] sm:$0xf]
    %v121 = vld [vmem:[#allocation6 + $0xb8] sm:$0xf]
    %v122 = vld [vmem:[#allocation6 + $0xbc] sm:$0xf]
    %v123 = vld [vmem:[#allocation6 + $0xc0] sm:$0xf]
    %v124 = vld [vmem:[#allocation6 + $0xc4] sm:$0xf]
    %v125 = vld [vmem:[#allocation6 + $0xc8] sm:$0xf]
    %v126 = vld [vmem:[#allocation6 + $0xcc] sm:$0xf]
    %v127 = vld [vmem:[#allocation6 + $0xd0] sm:$0xf]
    %v128 = vld [vmem:[#allocation6 + $0xd4] sm:$0xf]
    %v129 = vld [vmem:[#allocation6 + $0xd8] sm:$0xf]
    %v130 = vld [vmem:[#allocation6 + $0xdc] sm:$0xf]
    %v131 = vld [vmem:[#allocation6 + $0xe0] sm:$0xf]
    %v132 = vld [vmem:[#allocation6 + $0xe4] sm:$0xf]
    %v133 = vld [vmem:[#allocation6 + $0xe8] sm:$0xf]
    %v134 = vld [vmem:[#allocation6 + $0xec] sm:$0xf]
    %v135 = vld [vmem:[#allocation6 + $0xf0] sm:$0xf]
    %v136 = vld [vmem:[#allocation6 + $0xf4] sm:$0xf]
    %v137 = vld [vmem:[#allocation6 + $0xf8] sm:$0xf]
    %v138 = vld [vmem:[#allocation6 + $0xfc] sm:$0xf]
    %v203 = vunpack.c.l.b16 %v75
    %v204 = vunpack.c.l.b16 %v76
    %v205 = vunpack.c.l.b16 %v77
    %v206 = vunpack.c.l.b16 %v78
    %v207 = vunpack.c.l.b16 %v79
    %v208 = vunpack.c.l.b16 %v80
    %v209 = vunpack.c.l.b16 %v81
    %v210 = vunpack.c.l.b16 %v82
    %v211 = vunpack.c.l.b16 %v83
    %v212 = vunpack.c.l.b16 %v84
    %v213 = vunpack.c.l.b16 %v85
    %v214 = vunpack.c.l.b16 %v86
    %v215 = vunpack.c.l.b16 %v87
    %v216 = vunpack.c.l.b16 %v88
    %v217 = vunpack.c.l.b16 %v89
    %v218 = vunpack.c.l.b16 %v90
    %v219 = vunpack.c.l.b16 %v91
    %v220 = vunpack.c.l.b16 %v92
    %v221 = vunpack.c.l.b16 %v93
    %v222 = vunpack.c.l.b16 %v94
    %v223 = vunpack.c.l.b16 %v95
    %v224 = vunpack.c.l.b16 %v96
    %v225 = vunpack.c.l.b16 %v97
    %v226 = vunpack.c.l.b16 %v98
    %v227 = vunpack.c.l.b16 %v99
    %v228 = vunpack.c.l.b16 %v100
    %v229 = vunpack.c.l.b16 %v101
    %v230 = vunpack.c.l.b16 %v102
    %v231 = vunpack.c.l.b16 %v103
    %v232 = vunpack.c.l.b16 %v104
    %v233 = vunpack.c.l.b16 %v105
    %v234 = vunpack.c.l.b16 %v106
    %v235 = vunpack.c.l.b16 %v107
    %v236 = vunpack.c.l.b16 %v108
    %v237 = vunpack.c.l.b16 %v109
    %v238 = vunpack.c.l.b16 %v110
    %v239 = vunpack.c.l.b16 %v111
    %v240 = vunpack.c.l.b16 %v112
    %v241 = vunpack.c.l.b16 %v113
    %v242 = vunpack.c.l.b16 %v114
    %v243 = vunpack.c.l.b16 %v115
    %v244 = vunpack.c.l.b16 %v116
    %v245 = vunpack.c.l.b16 %v117
    %v246 = vunpack.c.l.b16 %v118
    %v247 = vunpack.c.l.b16 %v119
    %v248 = vunpack.c.l.b16 %v120
    %v249 = vunpack.c.l.b16 %v121
    %v250 = vunpack.c.l.b16 %v122
    %v251 = vunpack.c.l.b16 %v123
    %v252 = vunpack.c.l.b16 %v124
    %v253 = vunpack.c.l.b16 %v125
    %v254 = vunpack.c.l.b16 %v126
    %v255 = vunpack.c.l.b16 %v127
    %v256 = vunpack.c.l.b16 %v128
    %v257 = vunpack.c.l.b16 %v129
    %v258 = vunpack.c.l.b16 %v130
    %v259 = vunpack.c.l.b16 %v131
    %v260 = vunpack.c.l.b16 %v132
    %v261 = vunpack.c.l.b16 %v133
    %v262 = vunpack.c.l.b16 %v134
    %v263 = vunpack.c.l.b16 %v135
    %v264 = vunpack.c.l.b16 %v136
    %v265 = vunpack.c.l.b16 %v137
    %v266 = vunpack.c.l.b16 %v138
    %v267 = vpack.c.b16 %v204, %v203
    %v268 = vpack.c.b16 %v206, %v205
    %v269 = vpack.c.b16 %v208, %v207
    %v270 = vpack.c.b16 %v210, %v209
    %v271 = vpack.c.b16 %v212, %v211
    %v272 = vpack.c.b16 %v214, %v213
    %v273 = vpack.c.b16 %v216, %v215
    %v274 = vpack.c.b16 %v218, %v217
    %v275 = vpack.c.b16 %v220, %v219
    %v276 = vpack.c.b16 %v222, %v221
    %v277 = vpack.c.b16 %v224, %v223
    %v278 = vpack.c.b16 %v226, %v225
    %v279 = vpack.c.b16 %v228, %v227
    %v280 = vpack.c.b16 %v230, %v229
    %v281 = vpack.c.b16 %v232, %v231
    %v282 = vpack.c.b16 %v234, %v233
    %v283 = vpack.c.b16 %v236, %v235
    %v284 = vpack.c.b16 %v238, %v237
    %v285 = vpack.c.b16 %v240, %v239
    %v286 = vpack.c.b16 %v242, %v241
    %v287 = vpack.c.b16 %v244, %v243
    %v288 = vpack.c.b16 %v246, %v245
    %v289 = vpack.c.b16 %v248, %v247
    %v290 = vpack.c.b16 %v250, %v249
    %v291 = vpack.c.b16 %v252, %v251
    %v292 = vpack.c.b16 %v254, %v253
    %v293 = vpack.c.b16 %v256, %v255
    %v294 = vpack.c.b16 %v258, %v257
    %v295 = vpack.c.b16 %v260, %v259
    %v296 = vpack.c.b16 %v262, %v261
    %v297 = vpack.c.b16 %v264, %v263
    %v298 = vpack.c.b16 %v266, %v265
    %331 = vmatprep.subr.bf16.mxu0 0
    %332 = vmatpush1.bf16.msra.mxu0 %v267
    %333 = vmatprep.subr.bf16.mxu0 0
    %334 = vmatpush1.bf16.msra.mxu0 %v268
    %335 = vmatprep.subr.bf16.mxu0 0
    %336 = vmatpush1.bf16.msra.mxu0 %v269
    %337 = vmatprep.subr.bf16.mxu0 0
    %338 = vmatpush1.bf16.msra.mxu0 %v270
    %339 = vmatprep.subr.bf16.mxu0 0
    %340 = vmatpush1.bf16.msra.mxu0 %v271
    %341 = vmatprep.subr.bf16.mxu0 0
    %342 = vmatpush1.bf16.msra.mxu0 %v272
    %343 = vmatprep.subr.bf16.mxu0 0
    %344 = vmatpush1.bf16.msra.mxu0 %v273
    %345 = vmatprep.subr.bf16.mxu0 0
    %346 = vmatpush1.bf16.msra.mxu0 %v274
    %347 = vmatprep.subr.bf16.mxu0 0
    %348 = vmatpush1.bf16.msra.mxu0 %v275
    %349 = vmatprep.subr.bf16.mxu0 0
    %350 = vmatpush1.bf16.msra.mxu0 %v276
    %351 = vmatprep.subr.bf16.mxu0 0
    %352 = vmatpush1.bf16.msra.mxu0 %v277
    %353 = vmatprep.subr.bf16.mxu0 0
    %354 = vmatpush1.bf16.msra.mxu0 %v278
    %355 = vmatprep.subr.bf16.mxu0 0
    %356 = vmatpush1.bf16.msra.mxu0 %v279
    %357 = vmatprep.subr.bf16.mxu0 0
    %358 = vmatpush1.bf16.msra.mxu0 %v280
    %359 = vmatprep.subr.bf16.mxu0 0
    %360 = vmatpush1.bf16.msra.mxu0 %v281
    %361 = vmatprep.subr.bf16.mxu0 0
    %362 = vmatpush1.bf16.msra.mxu0 %v282
    %363 = vmatprep.mubr.bf16.mxu0 %v72
    %364 = vmatmul.mubr.bf16.gmra.mrb[0].mxu0 %v71
    %v365 = vpop.f32.mrb[0].mxu0
    %v366 = vadd.f32 0.0, %v365
    %v367 = vpop.f32.mrb[0].mxu0
    %v368 = vpop.f32.mrb[0].mxu0
    %v369 = vpop.f32.mrb[0].mxu0
    %370 = vdwg.mxu0
    %371 = vmatprep.subr.bf16.mxu0 0
    %372 = vmatpush1.bf16.msra.mxu0 %v283
    %373 = vmatprep.subr.bf16.mxu0 0
    %374 = vmatpush1.bf16.msra.mxu0 %v284
    %375 = vmatprep.subr.bf16.mxu0 0
    %376 = vmatpush1.bf16.msra.mxu0 %v285
    %377 = vmatprep.subr.bf16.mxu0 0
    %378 = vmatpush1.bf16.msra.mxu0 %v286
    %379 = vmatprep.subr.bf16.mxu0 0
    %380 = vmatpush1.bf16.msra.mxu0 %v287
    %381 = vmatprep.subr.bf16.mxu0 0
    %382 = vmatpush1.bf16.msra.mxu0 %v288
    %383 = vmatprep.subr.bf16.mxu0 0
    %384 = vmatpush1.bf16.msra.mxu0 %v289
    %385 = vmatprep.subr.bf16.mxu0 0
    %386 = vmatpush1.bf16.msra.mxu0 %v290
    %387 = vmatprep.subr.bf16.mxu0 0
    %388 = vmatpush1.bf16.msra.mxu0 %v291
    %389 = vmatprep.subr.bf16.mxu0 0
    %390 = vmatpush1.bf16.msra.mxu0 %v292
    %391 = vmatprep.subr.bf16.mxu0 0
    %392 = vmatpush1.bf16.msra.mxu0 %v293
    %393 = vmatprep.subr.bf16.mxu0 0
    %394 = vmatpush1.bf16.msra.mxu0 %v294
    %395 = vmatprep.subr.bf16.mxu0 0
    %396 = vmatpush1.bf16.msra.mxu0 %v295
    %397 = vmatprep.subr.bf16.mxu0 0
    %398 = vmatpush1.bf16.msra.mxu0 %v296
    %399 = vmatprep.subr.bf16.mxu0 0
    %400 = vmatpush1.bf16.msra.mxu0 %v297
    %401 = vmatprep.subr.bf16.mxu0 0
    %402 = vmatpush1.bf16.msra.mxu0 %v298
    %403 = vmatprep.mubr.bf16.mxu0 %v74
    %404 = vmatmul.mubr.bf16.gmra.mrb[0].mxu0 %v73
    %v405 = vpop.f32.mrb[0].mxu0
    %v406 = vadd.f32 %v366, %v405
    %v407 = vpop.f32.mrb[0].mxu0
    %v408 = vpop.f32.mrb[0].mxu0
    %v409 = vpop.f32.mrb[0].mxu0
    %410 = vdwg.mxu0
    %v411 = vadd.f32 %v66, %v406
    %412 = vst [vmem:[#allocation2] sm:$0xff] %v411
    // Predicated region
    $region38: #{tpu_custom_call.1} parent=1 // pred_check
      %p413 = pneg %p61
    $region39: #{tpu_custom_call.1} parent=1 // pred_check_branch
      %415 = sbr.rel (%p413) target = $region41
    $region40: #{tpu_custom_call.1} parent=1 // pred_region
      %v416 = vld [vmem:[#allocation2] sm:$0xff]
      %v417 = vld [vmem:[%s2] sm:$0x1]
      %v419 = vlaneseq
      %v420 = vshrl.u32 %v419, 7
      %v421 = vsub.s32 0, %v420
      %v422 = vrot.slane %v417, %v421
      %v424 = vadd.f32 %v416, %v422
      %v425 = vmax.f32 %v424, 0.0
      %v426 = vpack.c.bf16 %v425, %v425
      %v427 = vld [vmem:[#allocation8] sm:$0xf]
      %v428 = vld [vmem:[#allocation8 + $0x4] sm:$0xf]
      %v429 = vld [vmem:[#allocation8 + $0x8] sm:$0xf]
      %v430 = vld [vmem:[#allocation8 + $0xc] sm:$0xf]
      %v431 = vld [vmem:[#allocation8 + $0x10] sm:$0xf]
      %v432 = vld [vmem:[#allocation8 + $0x14] sm:$0xf]
      %v433 = vld [vmem:[#allocation8 + $0x18] sm:$0xf]
      %v434 = vld [vmem:[#allocation8 + $0x1c] sm:$0xf]
      %v435 = vld [vmem:[#allocation8 + $0x20] sm:$0xf]
      %v436 = vld [vmem:[#allocation8 + $0x24] sm:$0xf]
      %v437 = vld [vmem:[#allocation8 + $0x28] sm:$0xf]
      %v438 = vld [vmem:[#allocation8 + $0x2c] sm:$0xf]
      %v439 = vld [vmem:[#allocation8 + $0x30] sm:$0xf]
      %v440 = vld [vmem:[#allocation8 + $0x34] sm:$0xf]
      %v441 = vld [vmem:[#allocation8 + $0x38] sm:$0xf]
      %v442 = vld [vmem:[#allocation8 + $0x3c] sm:$0xf]
      %v443 = vld [vmem:[%s4] sm:$0x1]
      %v445 = vlaneseq
      %v446 = vshrl.u32 %v445, 7
      %v447 = vsub.s32 0, %v446
      %v448 = vrot.slane %v443, %v447
      %v466 = vunpack.c.l.b16 %v427
      %v467 = vunpack.c.l.b16 %v428
      %v468 = vunpack.c.l.b16 %v429
      %v469 = vunpack.c.l.b16 %v430
      %v470 = vunpack.c.l.b16 %v431
      %v471 = vunpack.c.l.b16 %v432
      %v472 = vunpack.c.l.b16 %v433
      %v473 = vunpack.c.l.b16 %v434
      %v474 = vunpack.c.l.b16 %v435
      %v475 = vunpack.c.l.b16 %v436
      %v476 = vunpack.c.l.b16 %v437
      %v477 = vunpack.c.l.b16 %v438
      %v478 = vunpack.c.l.b16 %v439
      %v479 = vunpack.c.l.b16 %v440
      %v480 = vunpack.c.l.b16 %v441
      %v481 = vunpack.c.l.b16 %v442
      %v482 = vpack.c.b16 %v467, %v466
      %v483 = vpack.c.b16 %v469, %v468
      %v484 = vpack.c.b16 %v471, %v470
      %v485 = vpack.c.b16 %v473, %v472
      %v486 = vpack.c.b16 %v475, %v474
      %v487 = vpack.c.b16 %v477, %v476
      %v488 = vpack.c.b16 %v479, %v478
      %v489 = vpack.c.b16 %v481, %v480
      %498 = vmatprep.subr.bf16.mxu0 0
      %499 = vmatpush1.bf16.msra.mxu0 %v482
      %500 = vmatprep.subr.bf16.mxu0 0
      %501 = vmatpush1.bf16.msra.mxu0 %v483
      %502 = vmatprep.subr.bf16.mxu0 0
      %503 = vmatpush1.bf16.msra.mxu0 %v484
      %504 = vmatprep.subr.bf16.mxu0 0
      %505 = vmatpush1.bf16.msra.mxu0 %v485
      %506 = vmatprep.subr.bf16.mxu0 0
      %507 = vmatpush1.bf16.msra.mxu0 %v486
      %508 = vmatprep.subr.bf16.mxu0 0
      %509 = vmatpush1.bf16.msra.mxu0 %v487
      %510 = vmatprep.subr.bf16.mxu0 0
      %511 = vmatpush1.bf16.msra.mxu0 %v488
      %512 = vmatprep.subr.bf16.mxu0 0
      %513 = vmatpush1.bf16.msra.mxu0 %v489
      %514 = vmatprep.subr.bf16.mxu0 0
      %515 = vmatpush1.bf16.msra.mxu0 0
      %516 = vmatprep.subr.bf16.mxu0 0
      %517 = vmatpush1.bf16.msra.mxu0 0
      %518 = vmatprep.subr.bf16.mxu0 0
      %519 = vmatpush1.bf16.msra.mxu0 0
      %520 = vmatprep.subr.bf16.mxu0 0
      %521 = vmatpush1.bf16.msra.mxu0 0
      %522 = vmatprep.subr.bf16.mxu0 0
      %523 = vmatpush1.bf16.msra.mxu0 0
      %524 = vmatprep.subr.bf16.mxu0 0
      %525 = vmatpush1.bf16.msra.mxu0 0
      %526 = vmatprep.subr.bf16.mxu0 0
      %527 = vmatpush1.bf16.msra.mxu0 0
      %528 = vmatprep.subr.bf16.mxu0 0
      %529 = vmatpush1.bf16.msra.mxu0 0
      %530 = vmatprep.mubr.bf16.mxu0 0
      %531 = vmatmul.mubr.bf16.gmra.mrb[0].mxu0 %v426
      %v532 = vpop.f32.mrb[0].mxu0
      %v533 = vadd.f32 %v448, %v532
      %v534 = vpop.f32.mrb[0].mxu0
      %v535 = vpop.f32.mrb[0].mxu0
      %v536 = vpop.f32.mrb[0].mxu0
      %537 = vdwg.mxu0
      %538 = vst [vmem:[#allocation9] sm:$0xff] %v533
    $region41: #{tpu_custom_call.1} parent=1 // pred_fallthru
      _
    // Predicated region
    $region42: #{tpu_custom_call.1} parent=1 // pred_check
      _
    $region43: #{tpu_custom_call.1} parent=1 // pred_check_branch
      %540 = sbr.rel (0) target = $region45
    $region44: #{tpu_custom_call.1} parent=1 // pred_region
      %s542 = ssub.s32 128, 128
      %543 = vsyncadd [#allocation5], %s542
      %s545 = sshll.u32 [#allocation9], 4
      %s546 = int_to_ptr.vmem [resolvable:$true] %s545
      %548 = dma.vmem_to_hbm [thread:$0]  %s546, 128, %s5, [#allocation5]
    $region45: #{tpu_custom_call.1} parent=1 // pred_fallthru
      _
    // Predicated region
    $region46: #{tpu_custom_call.1} parent=1 // pred_check
      _
    $region47: #{tpu_custom_call.1} parent=1 // pred_check_branch
      %550 = sbr.rel (0) target = $region49
    $region48: #{tpu_custom_call.1} parent=1 // pred_region
      %551 = dma.done [#allocation5], 128
    $region49: #{tpu_custom_call.1} parent=1 // pred_fallthru
      _
    %552 = vsyncpa [#allocation4], 1
    %553 = vsyncpa [#allocation7], 1
    %554 = vsyncpa [#allocation5], 1

</llo_original>
